<compile_context>
chip_gen: v5e
topology: v5e:2x2
jax: 0.10.0
libtpu: 0.0.40
codegen_flags: <defaults>
</compile_context>

<pallas_src>
import functools

import jax
import jax.numpy as jnp
from jax import lax
from jax.experimental import pallas as pl
from jax.experimental.pallas import tpu as pltpu

_LANES = 128
_TARGET_BLOCK_BYTES = 4 * 1024 * 1024      # ~4 MiB per block
_MIN_GRID_STEPS = 8                        # >= 4 blocks per TC on dual-TC chips
_VMEM_LIMIT_BYTES = 32 * 1024 * 1024       # explicit scoped-VMEM budget (safe on v5e/v6e/v7x)


def _min_sublanes(dtype) -> int:
    """Minimum sublane multiple for a clean (sublane, 128) tile per dtype width."""
    itemsize = jnp.dtype(dtype).itemsize
    return {4: 8, 2: 16, 1: 32}.get(itemsize, 8)


def _round_up(n: int, m: int) -> int:
    return ((n + m - 1) // m) * m


def _act_kernel(x_ref, o_ref, *, activation: str):
    x = x_ref[...]
    if activation == "relu":
        o_ref[...] = jnp.maximum(x, 0)
    else:
        # nn.GELU() default = exact (erf-based) GELU: 0.5 * x * (1 + erf(x/sqrt(2))).
        # Computed in f32 for exactness (no-op cast when the input is already f32).
        xf = x.astype(jnp.float32)
        y = 0.5 * xf * (1.0 + lax.erf(xf * jnp.float32(0.7071067811865476)))
        o_ref[...] = y.astype(o_ref.dtype)


def _choose_tile_rows(rows: int, itemsize: int, min_sub: int) -> int:
    """Pick a block row count: ~4 MiB, sublane-aligned, balanced >= _MIN_GRID_STEPS grid."""
    target_rows = max(
        min_sub,
        (_TARGET_BLOCK_BYTES // (_LANES * itemsize)) // min_sub * min_sub,
    )
    if rows <= min_sub:
        # Single full-extent block (full extent is always a legal block dim).
        return rows
    # Prefer at least _MIN_GRID_STEPS blocks so dual-TC chips get >= 4 blocks/core
    # and DMA/compute actually overlap, but never shrink below the min tile.
    cap = max(min_sub, _round_up(pl.cdiv(rows, _MIN_GRID_STEPS), min_sub))
    tile = min(target_rows, cap)
    if tile >= rows:
        return rows
    # Rebalance so the last block is not a tiny ragged tail (idles one core).
    nblk = pl.cdiv(rows, tile)
    tile = min(rows, _round_up(pl.cdiv(rows, nblk), min_sub))
    return tile


def act(x: jax.Array, activation: str = "gelu") -> jax.Array:
    """Elementwise activation via a Pallas TPU kernel.

    Matches `Act(activation)(x)` from the PyTorch module: 'relu' -> nn.ReLU(),
    anything else -> nn.GELU() (exact erf form).
    """
    orig_shape = x.shape
    orig_dtype = x.dtype
    total = x.size
    itemsize = jnp.dtype(orig_dtype).itemsize
    min_sub = _min_sublanes(orig_dtype)

    # Lane-dense 2-D view (rows, 128). When total % 128 == 0 (the common case for
    # contiguous NCHW/NLC tensors) this is a pure bitcast reshape: no extra HBM
    # traffic. Only when total % 128 != 0 do we pad (zeros are a fixed point of
    # both relu and gelu, and the pad region is sliced off below).
    # TODO(synk): for the rare ragged case, a full-extent (< 128) lane dim would
    # avoid the two extra HBM passes from concat + slice at the cost of masked
    # lane stores.
    rows = pl.cdiv(total, _LANES)
    pad = rows * _LANES - total
    if pad:
        x_flat = jnp.concatenate(
            [x.reshape(-1), jnp.zeros((pad,), dtype=orig_dtype)]
        )
        x2d = x_flat.reshape(rows, _LANES)
    else:
        x2d = x.reshape(rows, _LANES)

    tile_rows = _choose_tile_rows(rows, itemsize, min_sub)
    grid = (pl.cdiv(rows, tile_rows),)

    kernel = functools.partial(_act_kernel, activation=activation)

    padded_total = rows * _LANES
    if activation == "relu":
        flops, transcendentals = padded_total, 0
    else:
        flops, transcendentals = 4 * padded_total, padded_total
    cost = pl.CostEstimate(
        flops=flops,
        transcendentals=transcendentals,
        bytes_accessed=2 * padded_total * itemsize,
    )

    y2d = pl.pallas_call(
        kernel,
        out_shape=jax.ShapeDtypeStruct((rows, _LANES), orig_dtype),
        grid_spec=pltpu.PrefetchScalarGridSpec(
            num_scalar_prefetch=0,
            grid=grid,
            in_specs=[pl.BlockSpec((tile_rows, _LANES), lambda i: (i, 0))],
            out_specs=pl.BlockSpec((tile_rows, _LANES), lambda i: (i, 0)),
        ),
        compiler_params=pltpu.CompilerParams(
            dimension_semantics=("parallel",),
            vmem_limit_bytes=_VMEM_LIMIT_BYTES,
        ),
        cost_estimate=cost,
    )(x2d)

    y_flat = y2d.reshape(-1)
    if pad:
        y_flat = y_flat[:total]
    return y_flat.reshape(orig_shape)


if __name__ == "__main__":
    key = jax.random.PRNGKey(0)
    # NCHW input, like a PyTorch conv activation input.
    x = jax.random.normal(key, (2, 4, 16, 16), dtype=jnp.float32)

    ref_gelu = 0.5 * x * (1.0 + lax.erf(x / jnp.sqrt(2.0)))
    ref_relu = jnp.maximum(x, 0.0)

    # GELU path (module default when activation != 'relu').
    y_gelu = act(x, "gelu")
    jax.block_until_ready(y_gelu)
    assert y_gelu.shape == x.shape and y_gelu.dtype == x.dtype
    assert jnp.allclose(y_gelu, ref_gelu, atol=1e-5, rtol=1e-5)

    # ReLU path.
    y_relu = act(x, "relu")
    jax.block_until_ready(y_relu)
    assert y_relu.shape == x.shape and y_relu.dtype == x.dtype
    assert jnp.allclose(y_relu, ref_relu)

    # bf16 path (exercises the dtype-aware 16-sublane tile rounding).
    x_bf16 = x.astype(jnp.bfloat16)
    y_bf16 = act(x_bf16, "gelu")
    jax.block_until_ready(y_bf16)
    assert y_bf16.shape == x.shape and y_bf16.dtype == jnp.bfloat16
    assert jnp.allclose(
        y_bf16.astype(jnp.float32),
        ref_gelu.astype(jnp.bfloat16).astype(jnp.float32),
        atol=3e-2,
        rtol=3e-2,
    )

    # Ragged-size input (total % 128 != 0) exercises the padding fallback.
    x_rag = jax.random.normal(jax.random.PRNGKey(1), (3, 5, 7), dtype=jnp.float32)
    y_rag = act(x_rag, "gelu")
    jax.block_until_ready(y_rag)
    ref_rag = 0.5 * x_rag * (1.0 + lax.erf(x_rag / jnp.sqrt(2.0)))
    assert y_rag.shape == x_rag.shape
    assert jnp.allclose(y_rag, ref_rag, atol=1e-5, rtol=1e-5)

    print("KERNEL_OK")
</pallas_src>

<mosaic_0001>
module attributes {stable_mosaic.version = 11 : i64} {
  func.func @_act_kernel(%arg0: i32, %arg1: memref<8x128xf32, #tpu.memory_space<vmem>>, %arg2: memref<8x128xf32, #tpu.memory_space<vmem>>) attributes {dimension_semantics = [#tpu.dimension_semantics<parallel>], iteration_bounds = array<i64: 2>, scalar_prefetch = 0 : i64, scratch_operands = 0 : i64, tpu.core_type = #tpu.core_type<tc>, window_params = [{transform_indices = @transform_0, window_bounds = array<i64: 8, 128>}, {transform_indices = @transform_1, window_bounds = array<i64: 8, 128>}]} {
    %c0 = arith.constant 0 : index
    %c0_0 = arith.constant 0 : index
    %0 = vector.load %arg1[%c0, %c0_0] : memref<8x128xf32, #tpu.memory_space<vmem>>, vector<8x128xf32>
    %cst = arith.constant 5.000000e-01 : f32
    %1 = vector.broadcast %cst : f32 to vector<8x128xf32>
    %2 = arith.mulf %1, %0 : vector<8x128xf32>
    %cst_1 = arith.constant 0.707106769 : f32
    %3 = vector.broadcast %cst_1 : f32 to vector<8x128xf32>
    %4 = arith.mulf %0, %3 : vector<8x128xf32>
    %5 = math.erf %4 : vector<8x128xf32>
    %cst_2 = arith.constant 1.000000e+00 : f32
    %6 = vector.broadcast %cst_2 : f32 to vector<8x128xf32>
    %7 = arith.addf %6, %5 : vector<8x128xf32>
    %8 = arith.mulf %2, %7 : vector<8x128xf32>
    %c0_3 = arith.constant 0 : index
    %c0_4 = arith.constant 0 : index
    %9 = vector.load %arg2[%c0_3, %c0_4] : memref<8x128xf32, #tpu.memory_space<vmem>>, vector<8x128xf32>
    tpu.vector_store %arg2[%c0_3, %c0_4], %8 {strides = array<i32>} : memref<8x128xf32, #tpu.memory_space<vmem>>, vector<8x128xf32>,
    return
  }
  func.func @transform_0(%arg0: i32) -> (i32, i32) {
    %c0_i32 = arith.constant 0 : i32
    %c0_i32_0 = arith.constant 0 : i32
    return %arg0, %c0_i32 : i32, i32
  }
  func.func @transform_1(%arg0: i32) -> (i32, i32) {
    %c0_i32 = arith.constant 0 : i32
    %c0_i32_0 = arith.constant 0 : i32
    return %arg0, %c0_i32 : i32, i32
  }
}

</mosaic_0001>

<llo_original>
// kernel: tpu_custom_call.1
$region0: #{tpu_custom_call.1}
  #allocation0 [shape = 'u32[]', space=smem, size = 0x4, offset = 0x4, fixed_abs, tag = 'smem constant byte address 0x4 - core index']
  #allocation1 [shape = 'u32[72,128]{1,0:T(1,128)}', space=vmem, size = 0x9000, scoped, tag = 'internal scratch']
  %s0 = inlined_call_operand.hbm [shape: f32[16,128], index: 0, kind: input, shape index: {}]
  %s1 = inlined_call_operand.hbm [shape: f32[16,128], index: 1, kind: output, shape index: {}]
  %s2 = sld [smem:[#allocation0]]
  $region41: #{tpu_custom_call.1} parent=0
    _
  %s4 = ssub.s32 1, %s2
  %s5 = scalar_select 0, %s4, %s2
  $region1: #{tpu_custom_call.1} parent=0
    #allocation2 [shape = 'u8[8192]{0}', space=vmem, size = 0x2000, scoped, tag = 'input window, operand 0']
    #allocation3 [shape = 's32[2]{0}', space=sflag, size = 0x8, scoped, tag = 'scoped memory for tpu_custom_call.1']
    #allocation4 [shape = 's32[2]{0}', space=sflag, size = 0x8, scoped, tag = 'scoped memory for tpu_custom_call.1']
    #allocation5 [shape = 'u8[8192]{0}', space=vmem, size = 0x2000, scoped, tag = 'output window, operand 0']
    %6 = vsyncpa [#allocation3], 0
    %s7 = scalar_lea.sflag [#allocation3], 1
    %8 = vsyncpa %s7, 0
    %9 = vsyncpa [#allocation4], 0
    %s10 = scalar_lea.sflag [#allocation4], 1
    %11 = vsyncpa %s10, 0
    loop: start=0, step=1, limit=4
    $region2: #{tpu_custom_call.1} parent=1 // loop_pre_header
      _
    $region3: #{tpu_custom_call.1} parent=1 // loop_header
      %s13 = sphi 0, %s17
      %p14 = scmp.ge.s32.totalorder %s13, 4
      %s23 = sphi 0, %s25
      %s26 = sphi 0, %s23
      %s27 = sphi 0, %s26
      %s43 = sphi 0, %s27
      %s49 = sphi 0, %s51
      %s52 = sphi 0, %s49
      %s53 = sphi 0, %s52
      %s69 = sphi 0, %s53
    $region4: #{tpu_custom_call.1} parent=1 // loop_header_branch
      %16 = sbr.rel (%p14) target = $region8
    $region5: #{tpu_custom_call.1} parent=1 // loop_body
      %s18 = ssub.s32 %s13, 1
      %s19 = ssub.s32 %s13, 2
      %s20 = sadd.s32 %s13, 1
      %s21 = ssub.s32 %s13, %s20
      %p22 = scmp.eq.s32.totalorder %s21, 0
      %s24 = sadd.s32 %s23, 1
      %s25 = scalar_select %p22, %s23, %s24
      %p28 = pneg %p22
      %p29 = scmp.eq.s32.totalorder %s13, 1
      %p30 = por %p28, %p29
      %p31 = scmp.ne.s32.totalorder %s23, %s26
      %p32 = scmp.eq.s32.totalorder %s13, 0
      %p33 = por %p31, %p32
      %p34 = scmp.ne.s32.totalorder %s23, %s26
      %p35 = scmp.eq.s32.totalorder %s18, 1
      %p36 = por %p34, %p35
      %p37 = scmp.ne.s32.totalorder %s26, %s27
      %p38 = scmp.eq.s32.totalorder %s18, 0
      %p39 = por %p37, %p38
      %p40 = scmp.ne.s32.totalorder %s26, %s27
      %p41 = scmp.eq.s32.totalorder %s19, 1
      %p42 = por %p40, %p41
      %p44 = scmp.ne.s32.totalorder %s27, %s43
      %p45 = scmp.eq.s32.totalorder %s19, 0
      %p46 = por %p44, %p45
      %s47 = ssub.s32 %s13, %s20
      %p48 = scmp.eq.s32.totalorder %s47, 0
      %s50 = sadd.s32 %s49, 1
      %s51 = scalar_select %p48, %s49, %s50
      %p54 = pneg %p48
      %p55 = scmp.eq.s32.totalorder %s13, 1
      %p56 = por %p54, %p55
      %p57 = scmp.ne.s32.totalorder %s49, %s52
      %p58 = scmp.eq.s32.totalorder %s13, 0
      %p59 = por %p57, %p58
      %p60 = scmp.ne.s32.totalorder %s49, %s52
      %p61 = scmp.eq.s32.totalorder %s18, 1
      %p62 = por %p60, %p61
      %p63 = scmp.ne.s32.totalorder %s52, %s53
      %p64 = scmp.eq.s32.totalorder %s18, 0
      %p65 = por %p63, %p64
      %p66 = scmp.ne.s32.totalorder %s52, %s53
      %p67 = scmp.eq.s32.totalorder %s19, 1
      %p68 = por %p66, %p67
      %p70 = scmp.ne.s32.totalorder %s53, %s69
      %p71 = scmp.eq.s32.totalorder %s19, 0
      %p72 = por %p70, %p71
      %p73 = scmp.le.s32.totalorder 1, %s13
      %p74 = scmp.lt.s32.totalorder %s13, 3
      %p75 = pnand %p73, %p74
      %p76 = pneg %p75
      // Predicated region
      $region9: #{tpu_custom_call.1} parent=5 // pred_check
        _
      $region10: #{tpu_custom_call.1} parent=5 // pred_check_branch
        %78 = sbr.rel (%p75) target = $region12
      $region11: #{tpu_custom_call.1} parent=5 // pred_region
        %s79 = ssub.s32 %s13, 1
      $region12: #{tpu_custom_call.1} parent=5 // pred_fallthru
        _
      %p80 = scmp.lt.s32.totalorder %s13, 2
      // Predicated region
      $region13: #{tpu_custom_call.1} parent=5 // pred_check
        %p81 = pneg %p80
      $region14: #{tpu_custom_call.1} parent=5 // pred_check_branch
        %83 = sbr.rel (%p81) target = $region16
      $region15: #{tpu_custom_call.1} parent=5 // pred_region
        // Predicated region
        $region17: #{tpu_custom_call.1} parent=15 // pred_check
          %p84 = pneg %p33
        $region18: #{tpu_custom_call.1} parent=15 // pred_check_branch
          %86 = sbr.rel (%p84) target = $region20
        $region19: #{tpu_custom_call.1} parent=15 // pred_region
          %s87 = sand.u32 %s23, 1
          %s88 = scalar_lea.sflag [#allocation3], %s87
          %s89 = sand.u32 %s23, 1
          %s90 = smul.addr %s89, 8
          %s91 = scalar_lea.vmem [#allocation2], %s90
          %93 = vsyncadd %s88, 0
          %s94 = smul.addr %s13, 8
          %s95 = scalar_lea.hbm %s0, %s94
          %s97 = sshll.u32 %s95, 4
          %s98 = int_to_ptr.hbm [resolvable:$true] %s97
          %s99 = sshll.u32 %s91, 4
          %s100 = int_to_ptr.vmem [resolvable:$true] %s99
          %102 = dma.hbm_to_vmem [thread:$0]  %s98, 128, %s100, %s88
        $region20: #{tpu_custom_call.1} parent=15 // pred_fallthru
          _
      $region16: #{tpu_custom_call.1} parent=5 // pred_fallthru
        _
      %p103 = scmp.le.s32.totalorder 1, %s13
      %p104 = scmp.lt.s32.totalorder %s13, 3
      %p105 = pnand %p103, %p104
      %p106 = pneg %p105
      // Predicated region
      $region21: #{tpu_custom_call.1} parent=5 // pred_check
        _
      $region22: #{tpu_custom_call.1} parent=5 // pred_check_branch
        %108 = sbr.rel (%p105) target = $region24
      $region23: #{tpu_custom_call.1} parent=5 // pred_region
        %s109 = ssub.s32 %s13, 1
        %s110 = sand.u32 %s26, 1
        %s111 = scalar_lea.sflag [#allocation3], %s110
        %s112 = sand.u32 %s26, 1
        %s113 = smul.addr %s112, 8
        %s114 = scalar_lea.vmem [#allocation2], %s113
        // Predicated region
        $region25: #{tpu_custom_call.1} parent=23 // pred_check
          %p115 = pneg %p39
        $region26: #{tpu_custom_call.1} parent=23 // pred_check_branch
          %117 = sbr.rel (%p115) target = $region28
        $region27: #{tpu_custom_call.1} parent=23 // pred_region
          %119 = dma.done %s111, 128
        $region28: #{tpu_custom_call.1} parent=23 // pred_fallthru
          _
        %s120 = sand.u32 %s26, 1
        %s121 = scalar_lea.sflag [#allocation3], %s120
        %s122 = sand.u32 %s26, 1
        %s123 = smul.addr %s122, 8
        %s124 = scalar_lea.vmem [#allocation2], %s123
        %p125 = pneg %p39
        %p126 = pneg %p36
        %p127 = pneg %p65
        %p128 = pneg %p62
        %s129 = sand.u32 %s52, 1
        %s130 = scalar_lea.sflag [#allocation4], %s129
        %s131 = sand.u32 %s52, 1
        %s132 = smul.addr %s131, 8
        %s133 = scalar_lea.vmem [#allocation5], %s132
        %v134 = vld [vmem:[%s114] sm:$0xff]
        %v135 = vmul.f32 %v134, 0.5
        %v136 = vmul.f32 %v134, 0.70710677
        %v137 = vmul.f32 %v136, %v136
        %v138 = vmin.f32 16.0, %v137
        %v139 = vmul.f32 %v138, 2.1237322e-06
        %v140 = vadd.f32 %v139, 0.00028619796
        %v141 = vmul.f32 %v138, %v140
        %v142 = vadd.f32 %v141, 0.0036580483
        %v143 = vmul.f32 %v138, %v142
        %v144 = vadd.f32 %v143, 0.05243302
        %v145 = vmul.f32 %v138, %v144
        %v146 = vadd.f32 %v145, 0.18741608
        %v147 = vmul.f32 %v138, %v146
        %v148 = vadd.f32 %v147, 1.1283791
        %v149 = vmul.f32 %v136, %v148
        %v150 = vmul.f32 %v138, 3.8918573e-05
        %v151 = vadd.f32 %v150, 0.001143296
        %v152 = vmul.f32 %v138, %v151
        %v153 = vadd.f32 %v152, 0.014752088
        %v154 = vmul.f32 %v138, %v153
        %v155 = vadd.f32 %v154, 0.112945676
        %v156 = vmul.f32 %v138, %v155
        %v157 = vadd.f32 %v156, 0.4994258
        %v158 = vmul.f32 %v138, %v157
        %v159 = vadd.f32 %v158, 1.0
        %v160 = vrcp.pop %v159
        %v161 = vmul.f32 %v159, %v160
        %v162 = vsub.f32 1.0, %v161
        %v163 = vmul.f32 %v160, %v162
        %v164 = vadd.f32 %v160, %v163
        %vm165 = vweird.f32 %v159
        %vm166 = vweird.f32 %v160
        %vm167 = vmor %vm165, %vm166
        %v168 = vsel %vm167, %v160, %v164
        %v169 = vand.u32 2147483647, %v159
        %vm170 = vcmp.eq.f32.partialorder %v169, 8.507059e+37
        %v171 = vand.u32 %v159, 2147483648
        %v172 = vor.u32 1.1754944e-38, %v171
        %v173 = vsel %vm170, %v172, %v168
        %v174 = vmul.f32 %v149, %v173
        %v175 = vmin.f32 %v174, 1.0
        %v176 = vmax.f32 %v175, -1.0
        %v177 = vadd.f32 %v176, 1.0
        %v178 = vmul.f32 %v135, %v177
        %179 = vst [vmem:[%s133] sm:$0xff] %v178
        %s180 = sand.u32 %s52, 1
        %s181 = scalar_lea.sflag [#allocation4], %s180
        %s182 = sand.u32 %s52, 1
        %s183 = smul.addr %s182, 8
        %s184 = scalar_lea.vmem [#allocation5], %s183
        // Predicated region
        $region29: #{tpu_custom_call.1} parent=23 // pred_check
          %p185 = pneg %p62
        $region30: #{tpu_custom_call.1} parent=23 // pred_check_branch
          %187 = sbr.rel (%p185) target = $region32
        $region31: #{tpu_custom_call.1} parent=23 // pred_region
          %189 = vsyncadd %s181, 0
          %s190 = smul.addr %s18, 8
          %s191 = scalar_lea.hbm %s1, %s190
          %s193 = sshll.u32 %s184, 4
          %s194 = int_to_ptr.vmem [resolvable:$true] %s193
          %s195 = sshll.u32 %s191, 4
          %s196 = int_to_ptr.hbm [resolvable:$true] %s195
          %198 = dma.vmem_to_hbm [thread:$0]  %s194, 128, %s196, %s181
        $region32: #{tpu_custom_call.1} parent=23 // pred_fallthru
          _
      $region24: #{tpu_custom_call.1} parent=5 // pred_fallthru
        _
      %p199 = scmp.le.s32.totalorder 2, %s13
      // Predicated region
      $region33: #{tpu_custom_call.1} parent=5 // pred_check
        %p200 = pneg %p199
      $region34: #{tpu_custom_call.1} parent=5 // pred_check_branch
        %202 = sbr.rel (%p200) target = $region36
      $region35: #{tpu_custom_call.1} parent=5 // pred_region
        %s203 = ssub.s32 %s13, 2
        // Predicated region
        $region37: #{tpu_custom_call.1} parent=35 // pred_check
          %p204 = pneg %p68
        $region38: #{tpu_custom_call.1} parent=35 // pred_check_branch
          %206 = sbr.rel (%p204) target = $region40
        $region39: #{tpu_custom_call.1} parent=35 // pred_region
          %s207 = sand.u32 %s53, 1
          %s208 = scalar_lea.sflag [#allocation4], %s207
          %s209 = sand.u32 %s53, 1
          %s210 = smul.addr %s209, 8
          %s211 = scalar_lea.vmem [#allocation5], %s210
          %213 = dma.done %s208, 128
        $region40: #{tpu_custom_call.1} parent=35 // pred_fallthru
          _
      $region36: #{tpu_custom_call.1} parent=5 // pred_fallthru
        _
    $region6: #{tpu_custom_call.1} parent=1 // loop_footer
      %s17 = sadd.s32 1, %s13
    $region7: #{tpu_custom_call.1} parent=1 // loop_footer_branch
      %12 = sbr.rel target = $region3
    $region8: #{tpu_custom_call.1} parent=1 // loop_exit
      _
    %214 = vsyncpa [#allocation3], 1
    %s215 = scalar_lea.sflag [#allocation3], 1
    %216 = vsyncpa %s215, 1
    %217 = vsyncpa [#allocation4], 1
    %s218 = scalar_lea.sflag [#allocation4], 1
    %219 = vsyncpa %s218, 1

</llo_original>
